<compile_context>
chip_gen: v5e
topology: v5e:2x2
jax: 0.10.0
libtpu: 0.0.40
codegen_flags: <defaults>
</compile_context>

<pallas_src>
import jax
import jax.numpy as jnp
from jax.experimental import pallas as pl
from jax.experimental.pallas import tpu as pltpu


# ---------------------------------------------------------------------------
# Kernel: one fused matmul, one full-tile store.
#   lhs_ref: (2C, w+th)   per-tile block-diagonal [[col_t, 0], [0, row_t_i]]
#   sel_ref: (w+th, th*w) stacked one-hots (grid-invariant, fetched once)
#   out_ref: (2C, th*w)   one row-tile of the flattened (2C, h*w) slab
# ---------------------------------------------------------------------------
def _pos_embed_kernel(lhs_ref, sel_ref, out_ref):
    out_ref[...] = jnp.dot(
        lhs_ref[...], sel_ref[...], preferred_element_type=jnp.float32
    ).astype(out_ref.dtype)


# ---------------------------------------------------------------------------
# VMEM accounting / tile selection
# ---------------------------------------------------------------------------
def _tile_footprint_bytes(th, w, c):
    """Conservative per-step VMEM estimate (f32), incl. double buffering."""
    hw = th * w
    out_tile = 2 * (2 * c) * hw * 4          # output block, double-buffered
    sel = 2 * (w + th) * hw * 4              # selection matrix (2 bufs allocated)
    lhs = 2 * (2 * c) * (w + th) * 4         # tiny per-tile block-diagonal LHS
    mxu_out = (2 * c) * hw * 4               # matmul result before the store
    return out_tile + sel + lhs + mxu_out


def _vmem_caps():
    """Return (per-step budget, vmem_limit_bytes, physical VMEM capacity)."""
    try:
        cap = int(getattr(pltpu.get_tpu_info(), "vmem_capacity_bytes", 64 << 20))
    except Exception:
        cap = 64 << 20                       # safe default (v7x-sized)
    # v5e/v6e (128 MiB) -> 32 MiB budget; v7x (64 MiB) -> 16 MiB budget.
    budget = max(4 << 20, min(32 << 20, cap // 4))
    limit = min(max(2 * budget, 32 << 20), cap * 3 // 4)
    return budget, limit, cap


def _choose_row_tile(h, w, c, budget_bytes, want_multi_tile):
    """Largest divisor th of h with (th*w) % 128 == 0 (or th == h, i.e. full
    extent) whose footprint fits the budget.  If `want_multi_tile`, prefer the
    biggest tile with >= 2 grid steps so v7x's two TensorCores both get work."""
    candidates = [th for th in range(h, 0, -1)
                  if h % th == 0 and (th == h or (th * w) % 128 == 0)]
    fitting = [th for th in candidates
               if _tile_footprint_bytes(th, w, c) <= budget_bytes]
    if not fitting:
        return None
    if want_multi_tile:
        multi = [th for th in fitting if th < h]
        if multi:
            return multi[0]
    return fitting[0]


# ---------------------------------------------------------------------------
# Pure-XLA path: used for tiny slabs (pallas_call overhead > work) and as a
# guard for pathological shapes; also serves as the reference in __main__.
# ---------------------------------------------------------------------------
def _xla_pos_embed(bs, h, w, row_weight, col_weight):
    c = row_weight.shape[1]
    x_emb = jnp.asarray(col_weight, jnp.float32)[:w]                 # (w, C)
    y_emb = jnp.asarray(row_weight, jnp.float32)[:h]                 # (h, C)
    pos = jnp.concatenate(
        [jnp.broadcast_to(x_emb[None, :, :], (h, w, c)),
         jnp.broadcast_to(y_emb[:, None, :], (h, w, c))], axis=-1)   # (h, w, 2C)
    pos = jnp.transpose(pos, (2, 0, 1))[None]                        # (1, 2C, h, w)
    return jnp.broadcast_to(pos, (bs, 2 * c, h, w))


# ---------------------------------------------------------------------------
# Public wrapper
# ---------------------------------------------------------------------------
def position_embedding_learned(mask, row_weight, col_weight, *,
                               force_pallas=False, max_rows_per_tile=None):
    """mask: (bs, h, w); row_weight: (row_num_embed, C); col_weight: (col_num_embed, C).

    Returns (bs, 2*C, h, w) float32 position embedding (NCHW, like PyTorch).
    """
    bs, h, w = mask.shape
    row_num_embed, C = row_weight.shape
    col_num_embed, C2 = col_weight.shape
    assert C == C2, "row/col embeddings must share the feature dim"
    if h > row_num_embed or w > col_num_embed:
        raise ValueError(
            f"spatial size ({h},{w}) exceeds embedding tables "
            f"({row_num_embed},{col_num_embed}) — PyTorch would fail here too")
    two_c = 2 * C
    slab_bytes = two_c * h * w * 4

    # Fast path: for tiny slabs the custom-call + grid-step overhead exceeds
    # the actual work; plain XLA fusion wins.
    if slab_bytes < (1 << 20) and not force_pallas:
        return _xla_pos_embed(bs, h, w, row_weight, col_weight)

    budget, vmem_limit, cap = _vmem_caps()
    th = _choose_row_tile(h, w, C, budget,
                          want_multi_tile=slab_bytes >= (2 << 20))
    if th is None:
        # No lane-aligned divisor fits the budget (e.g. awkward h, w).  Try the
        # full slab under the raised vmem limit; otherwise fall back to XLA
        # rather than risking a VMEM OOM.
        if _tile_footprint_bytes(h, w, C) <= cap * 3 // 4:
            th = h
        else:
            return _xla_pos_embed(bs, h, w, row_weight, col_weight)
    if max_rows_per_tile is not None:
        valid = [t for t in range(min(th, max_rows_per_tile), 0, -1)
                 if h % t == 0 and (t == h or (t * w) % 128 == 0)]
        if valid:
            th = valid[0]
    num_tiles = h // th

    f32 = jnp.float32
    col_t = jnp.asarray(col_weight, f32)[:w].T                        # (C, w)
    row_t = jnp.asarray(row_weight, f32)[:h].T                        # (C, h)

    # Per-tile block-diagonal LHS: (num_tiles, 2C, w+th).
    row_tiles = row_t.reshape(C, num_tiles, th).transpose(1, 0, 2)    # (nt, C, th)
    lhs = jnp.zeros((num_tiles, two_c, w + th), f32)
    lhs = lhs.at[:, :C, :w].set(jnp.broadcast_to(col_t, (num_tiles, C, w)))
    lhs = lhs.at[:, C:, w:].set(row_tiles)

    # Grid-invariant stacked selection matrix: (w+th, th*w).
    k = jnp.arange(th * w, dtype=jnp.int32)
    p_col = jnp.arange(w, dtype=jnp.int32)[:, None] == (k % w)[None, :]
    p_row = jnp.arange(th, dtype=jnp.int32)[:, None] == (k // w)[None, :]
    sel = jnp.concatenate([p_col, p_row], axis=0).astype(f32)

    slab = pl.pallas_call(
        _pos_embed_kernel,
        out_shape=jax.ShapeDtypeStruct((two_c, h * w), jnp.float32),
        grid_spec=pltpu.PrefetchScalarGridSpec(
            num_scalar_prefetch=0,
            grid=(num_tiles,),
            in_specs=[
                # per-tile LHS: leading dim squeezed, last two dims full extent
                pl.BlockSpec((None, two_c, w + th), lambda i: (i, 0, 0)),
                # selection matrix: constant block index -> DMA'd once
                pl.BlockSpec((w + th, th * w), lambda i: (0, 0)),
            ],
            out_specs=pl.BlockSpec((two_c, th * w), lambda i: (0, i)),
        ),
        compiler_params=pltpu.CompilerParams(
            dimension_semantics=("parallel",),
            vmem_limit_bytes=vmem_limit,
        ),
    )(lhs, sel)

    # Batch dimension is identical for every b: broadcast outside the kernel.
    pos = slab.reshape(1, two_c, h, w)
    return jnp.broadcast_to(pos, (bs, two_c, h, w))


if __name__ == "__main__":
    # Small, module-consistent shapes.
    num_pos_feats = 32
    row_num_embed = 50
    col_num_embed = 50
    bs, h, w = 2, 16, 16

    key = jax.random.PRNGKey(0)
    k_row, k_col, k_mask = jax.random.split(key, 3)

    # nn.init.uniform_ -> U[0, 1)
    row_weight = jax.random.uniform(k_row, (row_num_embed, num_pos_feats), jnp.float32)
    col_weight = jax.random.uniform(k_col, (col_num_embed, num_pos_feats), jnp.float32)

    # ByteTensor-style mask; only its shape matters for the forward pass.
    mask = (jax.random.uniform(k_mask, (bs, h, w)) > 0.5).astype(jnp.uint8)

    # 1) Pallas path at the nominal small shape (single-tile grid).
    out = jax.block_until_ready(
        position_embedding_learned(mask, row_weight, col_weight, force_pallas=True))
    ref = _xla_pos_embed(bs, h, w, row_weight, col_weight)
    assert out.shape == (bs, 2 * num_pos_feats, h, w), out.shape
    assert out.dtype == jnp.float32
    assert jnp.allclose(out, ref), "mismatch vs reference (single-tile)"

    # 2) Exercise the multi-step grid / tiled flattened axis (grid=(4,)).
    h2, w2 = 32, 16
    mask2 = jnp.zeros((1, h2, w2), jnp.uint8)
    out2 = jax.block_until_ready(
        position_embedding_learned(mask2, row_weight, col_weight,
                                   force_pallas=True, max_rows_per_tile=8))
    ref2 = _xla_pos_embed(1, h2, w2, row_weight, col_weight)
    assert jnp.allclose(out2, ref2), "mismatch vs reference (tiled grid)"

    print("KERNEL_OK")
</pallas_src>

<mosaic_0001>
module attributes {stable_mosaic.version = 11 : i64} {
  func.func @_pos_embed_kernel(%arg0: i32, %arg1: memref<1x64x32xf32, #tpu.memory_space<vmem>>, %arg2: memref<32x256xf32, #tpu.memory_space<vmem>>, %arg3: memref<64x256xf32, #tpu.memory_space<vmem>>) attributes {dimension_semantics = [#tpu.dimension_semantics<parallel>], iteration_bounds = array<i64: 1>, scalar_prefetch = 0 : i64, scratch_operands = 0 : i64, tpu.core_type = #tpu.core_type<tc>, window_params = [{transform_indices = @transform_0, window_bounds = array<i64: 1, 64, 32>}, {pipeline_mode = #tpu.pipeline_mode<synchronous>, transform_indices = @transform_1, window_bounds = array<i64: 32, 256>}, {transform_indices = @transform_2, window_bounds = array<i64: 64, 256>}]} {
    %c0 = arith.constant 0 : index
    %c0_0 = arith.constant 0 : index
    %c0_1 = arith.constant 0 : index
    %0 = vector.load %arg1[%c0, %c0_0, %c0_1] : memref<1x64x32xf32, #tpu.memory_space<vmem>>, vector<1x64x32xf32>
    %1 = vector.shape_cast %0 : vector<1x64x32xf32> to vector<64x32xf32>
    %c0_2 = arith.constant 0 : index
    %c0_3 = arith.constant 0 : index
    %2 = vector.load %arg2[%c0_2, %c0_3] : memref<32x256xf32, #tpu.memory_space<vmem>>, vector<32x256xf32>
    %cst = arith.constant dense<0.000000e+00> : vector<64x256xf32>
    %3 = tpu.matmul %1, %2, %cst {dimension_numbers = #tpu.dot_dimension_numbers<[1], [0], [0], [1], [0, 0, 1, 1], [], []>} : vector<64x32xf32>, vector<32x256xf32>, vector<64x256xf32> -> vector<64x256xf32>
    %c0_4 = arith.constant 0 : index
    %c0_5 = arith.constant 0 : index
    %4 = vector.load %arg3[%c0_4, %c0_5] : memref<64x256xf32, #tpu.memory_space<vmem>>, vector<64x256xf32>
    tpu.vector_store %arg3[%c0_4, %c0_5], %3 {strides = array<i32>} : memref<64x256xf32, #tpu.memory_space<vmem>>, vector<64x256xf32>,
    return
  }
  func.func @transform_0(%arg0: i32) -> (i32, i32, i32) {
    %c0_i32 = arith.constant 0 : i32
    %c0_i32_0 = arith.constant 0 : i32
    %c0_i32_1 = arith.constant 0 : i32
    return %arg0, %c0_i32, %c0_i32_0 : i32, i32, i32
  }
  func.func @transform_1(%arg0: i32) -> (i32, i32) {
    %c0_i32 = arith.constant 0 : i32
    %c0_i32_0 = arith.constant 0 : i32
    %c0_i32_1 = arith.constant 0 : i32
    return %c0_i32, %c0_i32_0 : i32, i32
  }
  func.func @transform_2(%arg0: i32) -> (i32, i32) {
    %c0_i32 = arith.constant 0 : i32
    %c0_i32_0 = arith.constant 0 : i32
    return %c0_i32, %arg0 : i32, i32
  }
}

</mosaic_0001>

<llo_original>
// kernel: tpu_custom_call.1
$region0: #{tpu_custom_call.1}
  #allocation0 [shape = 'u32[]', space=smem, size = 0x4, offset = 0x4, fixed_abs, tag = 'smem constant byte address 0x4 - core index']
  #allocation1 [shape = 'u32[72,128]{1,0:T(1,128)}', space=vmem, size = 0x9000, scoped, tag = 'internal scratch']
  %s0 = inlined_call_operand.vmem [shape: f32[1,64,32], index: 0, kind: input, shape index: {}]
  %s1 = inlined_call_operand.vmem [shape: f32[32,256], index: 1, kind: input, shape index: {}]
  %s2 = inlined_call_operand.hbm [shape: f32[64,256], index: 2, kind: output, shape index: {}]
  %s3 = sld [smem:[#allocation0]]
  $region18: #{tpu_custom_call.1} parent=0
    _
  %s5 = ssub.s32 1, %s3
  %s6 = scalar_select 0, %s5, %s3
  $region1: #{tpu_custom_call.1} parent=0
    #allocation2 [shape = 'u8[65536]{0}', space=vmem, size = 0x10000, scoped, tag = 'output window, operand 0, single buffered']
    #allocation3 [shape = 's32[1]{0}', space=sflag, size = 0x4, scoped, tag = 'scoped memory for tpu_custom_call.1']
    %7 = vsyncpa [#allocation3], 0
    // Predicated region
    $region2: #{tpu_custom_call.1} parent=1 // pred_check
      _
    $region3: #{tpu_custom_call.1} parent=1 // pred_check_branch
      %9 = sbr.rel (0) target = $region5
    $region4: #{tpu_custom_call.1} parent=1 // pred_region
      _
    $region5: #{tpu_custom_call.1} parent=1 // pred_fallthru
      _
    // Predicated region
    $region6: #{tpu_custom_call.1} parent=1 // pred_check
      _
    $region7: #{tpu_custom_call.1} parent=1 // pred_check_branch
      %11 = sbr.rel (0) target = $region9
    $region8: #{tpu_custom_call.1} parent=1 // pred_region
      _
    $region9: #{tpu_custom_call.1} parent=1 // pred_fallthru
      _
    %v12 = vld [vmem:[%s0] sm:$0xff]
    %v13 = vld [vmem:[%s0 + $0x8] sm:$0xff]
    %v14 = vld [vmem:[%s0 + $0x10] sm:$0xff]
    %v15 = vld [vmem:[%s0 + $0x18] sm:$0xff]
    %v16 = vld [vmem:[%s0 + $0x20] sm:$0xff]
    %v17 = vld [vmem:[%s0 + $0x28] sm:$0xff]
    %v18 = vld [vmem:[%s0 + $0x30] sm:$0xff]
    %v19 = vld [vmem:[%s0 + $0x38] sm:$0xff]
    %v20 = vld [vmem:[%s1] sm:$0xff]
    %v21 = vld [vmem:[%s1 + $0x8] sm:$0xff]
    %v22 = vld [vmem:[%s1 + $0x10] sm:$0xff]
    %v23 = vld [vmem:[%s1 + $0x18] sm:$0xff]
    %v24 = vld [vmem:[%s1 + $0x20] sm:$0xff]
    %v25 = vld [vmem:[%s1 + $0x28] sm:$0xff]
    %v26 = vld [vmem:[%s1 + $0x30] sm:$0xff]
    %v27 = vld [vmem:[%s1 + $0x38] sm:$0xff]
    %vm28 = vcmask 261120
    %v30 = vsel %vm28, %v12, 0
    %v33 = vsel %vm28, %v13, 0
    %v36 = vsel %vm28, %v14, 0
    %v39 = vsel %vm28, %v15, 0
    %v42 = vsel %vm28, %v16, 0
    %v45 = vsel %vm28, %v17, 0
    %v48 = vsel %vm28, %v18, 0
    %v51 = vsel %vm28, %v19, 0
    %53 = vmatpush.msra.mxu0 0.0
    %54 = vmatpush.msra.mxu0 0.0
    %55 = vmatpush.msra.mxu0 0.0
    %56 = vmatpush.msra.mxu0 0.0
    %57 = vmatpush.msra.mxu0 0.0
    %58 = vmatpush.msra.mxu0 0.0
    %59 = vmatpush.msra.mxu0 0.0
    %60 = vmatpush.msra.mxu0 0.0
    %61 = vmatpush.msra.mxu0 0.0
    %62 = vmatpush.msra.mxu0 0.0
    %63 = vmatpush.msra.mxu0 0.0
    %64 = vmatpush.msra.mxu0 0.0
    %65 = vmatpush.msra.mxu0 %v26
    %66 = vmatpush.msra.mxu0 %v24
    %67 = vmatpush.msra.mxu0 %v22
    %68 = vmatpush.msra.mxu0 %v20
    %69 = vmatmul.f32.gmra.mxu0 %v30
    %v70 = vpop.f32.mrf.mxu0
    %v71 = vadd.f32 0.0, %v70
    %72 = vmatmul.f32.gmra.mxu0 %v33
    %v73 = vpop.f32.mrf.mxu0
    %v74 = vadd.f32 0.0, %v73
    %75 = vmatmul.f32.gmra.mxu0 %v36
    %v76 = vpop.f32.mrf.mxu0
    %v77 = vadd.f32 0.0, %v76
    %78 = vmatmul.f32.gmra.mxu0 %v39
    %v79 = vpop.f32.mrf.mxu0
    %v80 = vadd.f32 0.0, %v79
    %81 = vmatmul.f32.gmra.mxu0 %v42
    %v82 = vpop.f32.mrf.mxu0
    %v83 = vadd.f32 0.0, %v82
    %84 = vmatmul.f32.gmra.mxu0 %v45
    %v85 = vpop.f32.mrf.mxu0
    %v86 = vadd.f32 0.0, %v85
    %87 = vmatmul.f32.gmra.mxu0 %v48
    %v88 = vpop.f32.mrf.mxu0
    %v89 = vadd.f32 0.0, %v88
    %90 = vmatmul.f32.gmra.mxu0 %v51
    %v91 = vpop.f32.mrf.mxu0
    %v92 = vadd.f32 0.0, %v91
    %93 = vdwg.mxu0
    %94 = vmatpush.msra.mxu0 0.0
    %95 = vmatpush.msra.mxu0 0.0
    %96 = vmatpush.msra.mxu0 0.0
    %97 = vmatpush.msra.mxu0 0.0
    %98 = vmatpush.msra.mxu0 0.0
    %99 = vmatpush.msra.mxu0 0.0
    %100 = vmatpush.msra.mxu0 0.0
    %101 = vmatpush.msra.mxu0 0.0
    %102 = vmatpush.msra.mxu0 0.0
    %103 = vmatpush.msra.mxu0 0.0
    %104 = vmatpush.msra.mxu0 0.0
    %105 = vmatpush.msra.mxu0 0.0
    %106 = vmatpush.msra.mxu0 %v27
    %107 = vmatpush.msra.mxu0 %v25
    %108 = vmatpush.msra.mxu0 %v23
    %109 = vmatpush.msra.mxu0 %v21
    %110 = vmatmul.f32.gmra.mxu0 %v30
    %v111 = vpop.f32.mrf.mxu0
    %v112 = vadd.f32 0.0, %v111
    %113 = vmatmul.f32.gmra.mxu0 %v33
    %v114 = vpop.f32.mrf.mxu0
    %v115 = vadd.f32 0.0, %v114
    %116 = vmatmul.f32.gmra.mxu0 %v36
    %v117 = vpop.f32.mrf.mxu0
    %v118 = vadd.f32 0.0, %v117
    %119 = vmatmul.f32.gmra.mxu0 %v39
    %v120 = vpop.f32.mrf.mxu0
    %v121 = vadd.f32 0.0, %v120
    %122 = vmatmul.f32.gmra.mxu0 %v42
    %v123 = vpop.f32.mrf.mxu0
    %v124 = vadd.f32 0.0, %v123
    %125 = vmatmul.f32.gmra.mxu0 %v45
    %v126 = vpop.f32.mrf.mxu0
    %v127 = vadd.f32 0.0, %v126
    %128 = vmatmul.f32.gmra.mxu0 %v48
    %v129 = vpop.f32.mrf.mxu0
    %v130 = vadd.f32 0.0, %v129
    %131 = vmatmul.f32.gmra.mxu0 %v51
    %v132 = vpop.f32.mrf.mxu0
    %v133 = vadd.f32 0.0, %v132
    %134 = vdwg.mxu0
    %135 = vst [vmem:[#allocation2] sm:$0xff] %v71
    %136 = vst [vmem:[#allocation2 + $0x8] sm:$0xff] %v112
    %137 = vst [vmem:[#allocation2 + $0x10] sm:$0xff] %v74
    %138 = vst [vmem:[#allocation2 + $0x18] sm:$0xff] %v115
    %139 = vst [vmem:[#allocation2 + $0x20] sm:$0xff] %v77
    %140 = vst [vmem:[#allocation2 + $0x28] sm:$0xff] %v118
    %141 = vst [vmem:[#allocation2 + $0x30] sm:$0xff] %v80
    %142 = vst [vmem:[#allocation2 + $0x38] sm:$0xff] %v121
    %143 = vst [vmem:[#allocation2 + $0x40] sm:$0xff] %v83
    %144 = vst [vmem:[#allocation2 + $0x48] sm:$0xff] %v124
    %145 = vst [vmem:[#allocation2 + $0x50] sm:$0xff] %v86
    %146 = vst [vmem:[#allocation2 + $0x58] sm:$0xff] %v127
    %147 = vst [vmem:[#allocation2 + $0x60] sm:$0xff] %v89
    %148 = vst [vmem:[#allocation2 + $0x68] sm:$0xff] %v130
    %149 = vst [vmem:[#allocation2 + $0x70] sm:$0xff] %v92
    %150 = vst [vmem:[#allocation2 + $0x78] sm:$0xff] %v133
    // Predicated region
    $region10: #{tpu_custom_call.1} parent=1 // pred_check
      _
    $region11: #{tpu_custom_call.1} parent=1 // pred_check_branch
      %152 = sbr.rel (0) target = $region13
    $region12: #{tpu_custom_call.1} parent=1 // pred_region
      %154 = vsyncadd [#allocation3], 0
      %s155 = sshll.u32 [#allocation2], 4
      %s156 = int_to_ptr.vmem [resolvable:$true] %s155
      %s157 = sshll.u32 %s2, 4
      %s158 = int_to_ptr.hbm [resolvable:$true] %s157
      %163 = dma.vmem_to_hbm [thread:$0]  %s156, 2048, %s158, [#allocation3], 256, 256, 16
    $region13: #{tpu_custom_call.1} parent=1 // pred_fallthru
      _
    // Predicated region
    $region14: #{tpu_custom_call.1} parent=1 // pred_check
      _
    $region15: #{tpu_custom_call.1} parent=1 // pred_check_branch
      %165 = sbr.rel (0) target = $region17
    $region16: #{tpu_custom_call.1} parent=1 // pred_region
      %167 = dma.done [#allocation3], 2048
    $region17: #{tpu_custom_call.1} parent=1 // pred_fallthru
      _
    %168 = vsyncpa [#allocation3], 1

</llo_original>
